<compile_context>
chip_gen: v6e
topology: v6e:2x2x1
jax: 0.10.0
libtpu: 0.0.40
codegen_flags: <defaults>
</compile_context>

<pallas_src>
import jax
import jax.numpy as jnp
from jax.experimental import pallas as pl
from jax.experimental.pallas import tpu as pltpu

_LANE_CANDIDATES = (512, 256, 128)      # lane-dense last dim (multiple of 128)
_RESIDENT_BYTES_TARGET = 32 * 1024 * 1024   # 2 x (in + out) double-buffered blocks
_VMEM_LIMIT_BYTES = 40 * 1024 * 1024        # safe on v5e/v6e (128 MiB) and v7x (64 MiB)


def _norm_zero_one_kernel(min_max_ref, x_ref, o_ref):
    # min_max_ref: SMEM (2,) f32; x_ref / o_ref: VMEM (tile_rows, LANE) blocks.
    mn = min_max_ref[0]
    mx = min_max_ref[1]
    scale = 1.0 / (mx - mn)              # one scalar divide per grid step
    # (x - mn) * (1/(mx - mn)); 1-2 ulp from a true divide, well inside 1e-6.
    o_ref[...] = ((x_ref[...] - mn) * scale).astype(o_ref.dtype)


def _round_up(n: int, m: int) -> int:
    return ((n + m - 1) // m) * m


def _sublane_multiple(itemsize: int) -> int:
    # Minimum second-to-last block dim per dtype packing (f32:8, bf16:16, i8:32).
    return {1: 32, 2: 16, 4: 8, 8: 8}.get(itemsize, 8)


def norm_zero_one(x: jax.Array, min_max: jax.Array) -> jax.Array:
    """Pallas equivalent of NormZeroOne.forward: (x - min) / (max - min)."""
    orig_shape = x.shape
    min_max = jnp.asarray(min_max, dtype=jnp.float32)
    out_dtype = jnp.result_type(x.dtype, min_max.dtype)   # torch-style promotion

    if x.size == 0:
        return jnp.zeros(orig_shape, out_dtype)

    total = x.size
    flat = x.reshape(-1)

    lane = next((l for l in _LANE_CANDIDATES if total % l == 0), None)
    padded_total = total
    if lane is None:
        # TODO(synk): rare ragged case (total not a multiple of 128) still uses a
        # pad+slice fallback (one extra HBM pass); typical NCHW image tensors for
        # this module divide 128 and take the zero-copy path above.
        lane = 128
        padded_total = _round_up(total, lane)
        flat = jnp.pad(flat, (0, padded_total - total))

    x2 = flat.reshape(-1, lane)
    rows = x2.shape[0]

    in_item = jnp.dtype(x.dtype).itemsize
    out_item = jnp.dtype(out_dtype).itemsize
    sub = max(_sublane_multiple(in_item), _sublane_multiple(out_item))

    # Cap block size so double-buffered in+out stays within the resident target.
    bytes_per_row = lane * (in_item + out_item)
    max_tile_rows = max((_RESIDENT_BYTES_TARGET // (2 * bytes_per_row)) // sub * sub, sub)

    # Aim for >= 2 grid steps so the "parallel" axis can shard across v7x's two
    # TensorCores; tiny inputs use a single full-height block (block == full dim).
    half = _round_up(pl.cdiv(rows, 2), sub)
    if half >= rows:
        tile_rows = rows
    else:
        tile_rows = min(max_tile_rows, half)

    grid = (pl.cdiv(rows, tile_rows),)   # ragged last block handled by Pallas

    out2 = pl.pallas_call(
        _norm_zero_one_kernel,
        out_shape=jax.ShapeDtypeStruct(x2.shape, out_dtype),
        grid=grid,
        in_specs=[
            # min_max scalars: whole (2,) array in SMEM, reused every grid step.
            pl.BlockSpec(memory_space=pltpu.MemorySpace.SMEM),
            # x slab: one (tile_rows, lane) tile per grid step, auto-pipelined.
            pl.BlockSpec((tile_rows, lane), lambda i: (i, 0)),
        ],
        out_specs=pl.BlockSpec((tile_rows, lane), lambda i: (i, 0)),
        compiler_params=pltpu.CompilerParams(
            dimension_semantics=("parallel",),
            vmem_limit_bytes=_VMEM_LIMIT_BYTES,
        ),
    )(min_max, x2)

    out_flat = out2.reshape(-1)
    if padded_total != total:
        out_flat = out_flat[:total]
    return out_flat.reshape(orig_shape)


if __name__ == "__main__":
    key = jax.random.PRNGKey(0)

    # Module __init__ takes a (min, max) tuple -> non-persistent f32 buffer.
    min_max = jnp.asarray([-2.0, 6.0], dtype=jnp.float32)

    # Small NCHW input consistent with typical usage of this module.
    x = jax.random.normal(key, (2, 4, 16, 16), dtype=jnp.float32) * 4.0 + 1.0
    y = jax.block_until_ready(norm_zero_one(x, min_max))
    y_ref = (x - min_max[0]) / (min_max[1] - min_max[0])
    assert y.shape == x.shape
    assert jnp.allclose(y, y_ref, atol=1e-6, rtol=1e-6)

    # Second shape that exercises the zero-copy ragged-row path (partial block).
    k2 = jax.random.PRNGKey(1)
    x2 = jax.random.normal(k2, (2, 3, 24, 128), dtype=jnp.float32) * 3.0 - 1.0
    y2 = jax.block_until_ready(norm_zero_one(x2, min_max))
    y2_ref = (x2 - min_max[0]) / (min_max[1] - min_max[0])
    assert y2.shape == x2.shape
    assert jnp.allclose(y2, y2_ref, atol=1e-6, rtol=1e-6)

    print("KERNEL_OK")
</pallas_src>

<mosaic_0001>
module attributes {stable_mosaic.version = 11 : i64} {
  func.func @_norm_zero_one_kernel(%arg0: i32, %arg1: memref<2xf32, #tpu.memory_space<smem>>, %arg2: memref<4x512xf32, #tpu.memory_space<vmem>>, %arg3: memref<4x512xf32, #tpu.memory_space<vmem>>) attributes {dimension_semantics = [#tpu.dimension_semantics<parallel>], iteration_bounds = array<i64: 1>, scalar_prefetch = 0 : i64, scratch_operands = 0 : i64, tpu.core_type = #tpu.core_type<tc>, window_params = [{transform_indices = @transform_0, window_bounds = array<i64: 2>}, {transform_indices = @transform_1, window_bounds = array<i64: 4, 512>}, {transform_indices = @transform_2, window_bounds = array<i64: 4, 512>}]} {
    %c0 = arith.constant 0 : index
    %0 = memref.load %arg1[%c0] : memref<2xf32, #tpu.memory_space<smem>>
    %c1 = arith.constant 1 : index
    %1 = memref.load %arg1[%c1] : memref<2xf32, #tpu.memory_space<smem>>
    %2 = arith.subf %1, %0 : f32
    %cst = arith.constant 1.000000e+00 : f32
    %3 = arith.divf %cst, %2 : f32
    %c0_0 = arith.constant 0 : index
    %c0_1 = arith.constant 0 : index
    %4 = vector.load %arg2[%c0_0, %c0_1] : memref<4x512xf32, #tpu.memory_space<vmem>>, vector<4x512xf32>
    %5 = vector.broadcast %0 : f32 to vector<4x512xf32>
    %6 = arith.subf %4, %5 : vector<4x512xf32>
    %7 = vector.broadcast %3 : f32 to vector<4x512xf32>
    %8 = arith.mulf %6, %7 : vector<4x512xf32>
    %c0_2 = arith.constant 0 : index
    %c0_3 = arith.constant 0 : index
    %9 = vector.load %arg3[%c0_2, %c0_3] : memref<4x512xf32, #tpu.memory_space<vmem>>, vector<4x512xf32>
    tpu.vector_store %arg3[%c0_2, %c0_3], %8 {strides = array<i32>} : memref<4x512xf32, #tpu.memory_space<vmem>>, vector<4x512xf32>,
    return
  }
  func.func @transform_0(%arg0: i32) -> i32 {
    %c0_i32 = arith.constant 0 : i32
    %c0_i32_0 = arith.constant 0 : i32
    return %c0_i32 : i32
  }
  func.func @transform_1(%arg0: i32) -> (i32, i32) {
    %c0_i32 = arith.constant 0 : i32
    %c0_i32_0 = arith.constant 0 : i32
    return %arg0, %c0_i32 : i32, i32
  }
  func.func @transform_2(%arg0: i32) -> (i32, i32) {
    %c0_i32 = arith.constant 0 : i32
    %c0_i32_0 = arith.constant 0 : i32
    return %arg0, %c0_i32 : i32, i32
  }
}

</mosaic_0001>

<llo_original>
// kernel: tpu_custom_call.1
$region0: #{tpu_custom_call.1}
  #allocation0 [shape = 'u32[]', space=smem, size = 0x4, offset = 0x4, fixed_abs, tag = 'smem constant byte address 0x4 - core index']
  #allocation1 [shape = 'u32[144,128]{1,0:T(1,128)}', space=vmem, size = 0x12000, scoped, tag = 'internal scratch']
  %s0 = inlined_call_operand.hbm [shape: f32[2], index: 0, kind: input, shape index: {}]
  %s1 = inlined_call_operand.hbm [shape: f32[4,512], index: 1, kind: input, shape index: {}]
  %s2 = inlined_call_operand.hbm [shape: f32[4,512], index: 2, kind: output, shape index: {}]
  %s3 = sld [smem:[#allocation0]]
  $region26: #{tpu_custom_call.1} parent=0
    _
  %s5 = ssub.s32 1, %s3
  %s6 = scalar_select 0, %s5, %s3
  $region1: #{tpu_custom_call.1} parent=0
    #allocation2 [shape = 'u8[512]{0}', space=smem, size = 0x200, scoped, tag = 'input window, operand 0, single buffered']
    #allocation3 [shape = 's32[1]{0}', space=sflag, size = 0x4, scoped, tag = 'scoped memory for tpu_custom_call.1']
    #allocation4 [shape = 's32[1]{0}', space=sflag, size = 0x4, scoped, tag = 'scoped memory for tpu_custom_call.1']
    #allocation5 [shape = 's32[1]{0}', space=sflag, size = 0x4, scoped, tag = 'scoped memory for tpu_custom_call.1']
    #allocation6 [shape = 'u8[8192]{0}', space=vmem, size = 0x2000, scoped, tag = 'input window, operand 1, single buffered']
    #allocation7 [shape = 'u8[8192]{0}', space=vmem, size = 0x2000, scoped, tag = 'output window, operand 0, single buffered']
    %7 = vsyncpa [#allocation5], 0
    %8 = vsyncpa [#allocation3], 0
    %9 = vsyncpa [#allocation4], 0
    // Predicated region
    $region2: #{tpu_custom_call.1} parent=1 // pred_check
      _
    $region3: #{tpu_custom_call.1} parent=1 // pred_check_branch
      %11 = sbr.rel (0) target = $region5
    $region4: #{tpu_custom_call.1} parent=1 // pred_region
      %s13 = ssub.s32 16, 16
      %14 = vsyncadd [#allocation5], %s13
      %17 = dma.hbm_to_smem %s0, 16, [#allocation2], [#allocation5]
    $region5: #{tpu_custom_call.1} parent=1 // pred_fallthru
      _
    // Predicated region
    $region6: #{tpu_custom_call.1} parent=1 // pred_check
      _
    $region7: #{tpu_custom_call.1} parent=1 // pred_check_branch
      %19 = sbr.rel (0) target = $region9
    $region8: #{tpu_custom_call.1} parent=1 // pred_region
      %s21 = ssub.s32 256, 256
      %22 = vsyncadd [#allocation3], %s21
      %s24 = sshll.u32 [#allocation6], 4
      %s25 = int_to_ptr.vmem [resolvable:$true] %s24
      %27 = dma.hbm_to_vmem [thread:$0]  %s1, 256, %s25, [#allocation3]
    $region9: #{tpu_custom_call.1} parent=1 // pred_fallthru
      _
    // Predicated region
    $region10: #{tpu_custom_call.1} parent=1 // pred_check
      _
    $region11: #{tpu_custom_call.1} parent=1 // pred_check_branch
      %29 = sbr.rel (0) target = $region13
    $region12: #{tpu_custom_call.1} parent=1 // pred_region
      %30 = dma.done [#allocation5], 16
    $region13: #{tpu_custom_call.1} parent=1 // pred_fallthru
      _
    // Predicated region
    $region14: #{tpu_custom_call.1} parent=1 // pred_check
      _
    $region15: #{tpu_custom_call.1} parent=1 // pred_check_branch
      %32 = sbr.rel (0) target = $region17
    $region16: #{tpu_custom_call.1} parent=1 // pred_region
      %33 = dma.done [#allocation3], 256
    $region17: #{tpu_custom_call.1} parent=1 // pred_fallthru
      _
    %34 = sfence
    %s35 = sld [smem:[#allocation2]]
    %s36 = sld [smem:[#allocation2 + $0x1]]
    %s37 = ssub.f32 %s36, %s35
    %v38 = vstv %s37
    %v39 = vrcp.pop %v38
    %s40 = vtos %v39
    %v41 = vld [vmem:[#allocation6] sm:$0xff]
    %v42 = vld [vmem:[#allocation6 + $0x8] sm:$0xff]
    %v43 = vstv %s35
    %v44 = vsub.f32 %v41, %v43
    %v45 = vsub.f32 %v42, %v43
    %v46 = vstv %s40
    %v47 = vmul.f32 %v44, %v46
    %v48 = vmul.f32 %v45, %v46
    %49 = vst [vmem:[#allocation7] sm:$0xff] %v47
    %50 = vst [vmem:[#allocation7 + $0x8] sm:$0xff] %v48
    // Predicated region
    $region18: #{tpu_custom_call.1} parent=1 // pred_check
      _
    $region19: #{tpu_custom_call.1} parent=1 // pred_check_branch
      %52 = sbr.rel (0) target = $region21
    $region20: #{tpu_custom_call.1} parent=1 // pred_region
      %s54 = ssub.s32 256, 256
      %55 = vsyncadd [#allocation4], %s54
      %s57 = sshll.u32 [#allocation7], 4
      %s58 = int_to_ptr.vmem [resolvable:$true] %s57
      %60 = dma.vmem_to_hbm [thread:$0]  %s58, 256, %s2, [#allocation4]
    $region21: #{tpu_custom_call.1} parent=1 // pred_fallthru
      _
    // Predicated region
    $region22: #{tpu_custom_call.1} parent=1 // pred_check
      _
    $region23: #{tpu_custom_call.1} parent=1 // pred_check_branch
      %62 = sbr.rel (0) target = $region25
    $region24: #{tpu_custom_call.1} parent=1 // pred_region
      %63 = dma.done [#allocation4], 256
    $region25: #{tpu_custom_call.1} parent=1 // pred_fallthru
      _
    %64 = vsyncpa [#allocation3], 1
    %65 = vsyncpa [#allocation4], 1
    %66 = vsyncpa [#allocation5], 1

</llo_original>
